<compile_context>
chip_gen: v7x
topology: tpu7x:2x2x1
jax: 0.10.0
libtpu: 0.0.40
codegen_flags: <defaults>
</compile_context>

<pallas_src>
import functools

import jax
import jax.numpy as jnp
from jax.experimental import pallas as pl
from jax.experimental.pallas import tpu as pltpu


def _round_up(x, m):
    return (x + m - 1) // m * m


def _vmem_capacity_bytes():
    try:
        return int(pltpu.get_tpu_info().vmem_capacity_bytes)
    except Exception:
        return 64 * 1024 * 1024  # conservative fallback (v7x per-TC VMEM)


def _clinear_kernel(x2_ref, w_ref, bd_ref, bs_ref, out_ref, acc_ref):
    k = pl.program_id(2)

    @pl.when(k == 0)
    def _():
        acc_ref[...] = jnp.zeros_like(acc_ref)

    _, tm, tk = x2_ref.shape
    tn = out_ref.shape[2]

    # Single wide MXU dot: [x_re; x_im] (2*tm, tk) @ [Wr_j | Wi_j] (tk, 2*tn),
    # accumulated in place in f32.
    x = x2_ref[...].reshape(2 * tm, tk)
    acc_ref[...] += jnp.dot(x, w_ref[...], preferred_element_type=jnp.float32)

    @pl.when(k == pl.num_programs(2) - 1)
    def _():
        p = acc_ref[...]
        re_wr = p[:tm, :tn]
        re_wi = p[:tm, tn:]
        im_wr = p[tm:, :tn]
        im_wi = p[tm:, tn:]
        # out_re = x_re@Wr - x_im@Wi + (b_re - b_im)
        # out_im = x_im@Wr + x_re@Wi + (b_re + b_im)
        out_ref[0] = (re_wr - im_wi + bd_ref[...]).astype(out_ref.dtype)
        out_ref[1] = (im_wr + re_wi + bs_ref[...]).astype(out_ref.dtype)


@functools.partial(jax.jit, static_argnames=("compute_dtype",))
def clinear_forward(x, w_re_t, w_im_t, b_re, b_im, *, compute_dtype=jnp.bfloat16):
    """x: [..., Cin, 2]; w_*_t: [Cin, Cout] (pre-transposed); b_*: [Cout].

    compute_dtype: MXU input dtype (default bf16, full MXU rate on all gens);
    accumulation is always float32. Pass None for exact f32 compute.
    """
    *lead, cin, two = x.shape
    assert two == 2, "last dim must be (real, imag)"
    cin_w, cout = w_re_t.shape
    assert cin_w == cin

    out_dtype = x.dtype

    # [..., Cin, 2] -> planar [2, B, Cin] in one transpose pass.
    x2 = jnp.transpose(x.reshape(-1, cin, 2), (2, 0, 1))
    B = x2.shape[1]

    if compute_dtype is not None:
        x2 = x2.astype(compute_dtype)
        w_re_t = w_re_t.astype(compute_dtype)
        w_im_t = w_im_t.astype(compute_dtype)

    # Generation-aware tile caps and VMEM budget.
    vmem_cap = _vmem_capacity_bytes()
    if vmem_cap >= 100 * 1024 * 1024:          # v5e / v6e: 128 MiB VMEM
        cap_m, cap_n, cap_k = 512, 512, 1024
        vmem_limit = 80 * 1024 * 1024
    else:                                      # v7x: 64 MiB per TensorCore
        cap_m, cap_n, cap_k = 256, 512, 512
        vmem_limit = 40 * 1024 * 1024

    # Sublane granularity: 8 rows for 4-byte dtypes, 16 for bf16 (packed tiles).
    itemsize = jnp.dtype(compute_dtype if compute_dtype is not None else x.dtype).itemsize
    sub = {4: 8, 2: 16, 1: 32}.get(itemsize, 8)

    tm = min(cap_m, _round_up(B, sub))
    tk = min(cap_k, _round_up(cin, 128))
    tn = min(cap_n, _round_up(cout, 128))
    # v7x megacore: keep >=2 grid steps along a parallel axis when possible so
    # both TensorCores get work (near-zero cost on single-TC v5e/v6e).
    if (_round_up(B, tm) // tm == 1 and _round_up(cout, tn) // tn == 1
            and tm >= 2 * sub):
        tm = _round_up(tm // 2, sub)

    Bp = _round_up(B, tm)
    Kp = _round_up(cin, tk)
    Np = _round_up(cout, tn)

    x2 = jnp.pad(x2, ((0, 0), (0, Bp - B), (0, Kp - cin)))
    wr = jnp.pad(w_re_t, ((0, Kp - cin), (0, Np - cout)))
    wi = jnp.pad(w_im_t, ((0, Kp - cin), (0, Np - cout)))
    # Pack weights per output tile: block j of the packed weight is [Wr_j | Wi_j],
    # feeding the single fused dot. When tk==Kp and tn==Np the index_map below is
    # constant, so the packed weight is fetched once and stays VMEM-resident.
    nb = Np // tn
    w_cat = jnp.stack(
        [wr.reshape(Kp, nb, tn), wi.reshape(Kp, nb, tn)], axis=2
    ).reshape(Kp, 2 * Np)

    # Fold biases once: out_re gets (b_re - b_im), out_im gets (b_re + b_im).
    bd = jnp.pad((b_re - b_im).astype(jnp.float32), (0, Np - cout)).reshape(1, Np)
    bs = jnp.pad((b_re + b_im).astype(jnp.float32), (0, Np - cout)).reshape(1, Np)

    grid = (Bp // tm, Np // tn, Kp // tk)

    out = pl.pallas_call(
        _clinear_kernel,
        out_shape=jax.ShapeDtypeStruct((2, Bp, Np), out_dtype),
        grid_spec=pltpu.PrefetchScalarGridSpec(
            num_scalar_prefetch=0,
            grid=grid,
            in_specs=[
                pl.BlockSpec((2, tm, tk), lambda i, j, k: (0, i, k)),    # x (re, im)
                pl.BlockSpec((tk, 2 * tn), lambda i, j, k: (k, j)),      # [Wr_j|Wi_j]
                pl.BlockSpec((1, tn), lambda i, j, k: (0, j)),           # b_re - b_im
                pl.BlockSpec((1, tn), lambda i, j, k: (0, j)),           # b_re + b_im
            ],
            out_specs=pl.BlockSpec((2, tm, tn), lambda i, j, k: (0, i, j)),
            scratch_shapes=[
                pltpu.VMEM((2 * tm, 2 * tn), jnp.float32),   # fused f32 accumulator
            ],
        ),
        compiler_params=pltpu.CompilerParams(
            dimension_semantics=("parallel", "parallel", "arbitrary"),
            vmem_limit_bytes=vmem_limit,
        ),
    )(x2, w_cat, bd, bs)

    out = out[:, :B, :cout]            # strip padding   -> [2, B, Cout]
    out = jnp.moveaxis(out, 0, -1)     # interleave back -> [B, Cout, 2]
    # TODO(synk): if the surrounding model can consume planar (re, im) tensors,
    # keep the lane-dense [2, B, Cout] layout and skip this moveaxis/reshape.
    return out.reshape(*lead, cout, 2)


def xavier_uniform(key, shape, dtype=jnp.float32):
    # nn.init.xavier_uniform_ on a [fan_out, fan_in] Linear weight.
    fan_out, fan_in = shape
    limit = (6.0 / (fan_in + fan_out)) ** 0.5
    return jax.random.uniform(key, shape, dtype, minval=-limit, maxval=limit)


if __name__ == "__main__":
    in_channels, out_channels = 32, 32
    batch, seq = 2, 8

    key = jax.random.PRNGKey(0)
    k_x, k_wr, k_wi, k_br, k_bi = jax.random.split(key, 5)

    x = jax.random.normal(k_x, (batch, seq, in_channels, 2), jnp.float32)

    # PyTorch-layout [out, in] weights with xavier-uniform init.
    w_re = xavier_uniform(k_wr, (out_channels, in_channels))
    w_im = xavier_uniform(k_wi, (out_channels, in_channels))
    # nn.Linear default bias init: U(-1/sqrt(fan_in), 1/sqrt(fan_in))
    bound = 1.0 / (in_channels ** 0.5)
    b_re = jax.random.uniform(k_br, (out_channels,), jnp.float32, -bound, bound)
    b_im = jax.random.uniform(k_bi, (out_channels,), jnp.float32, -bound, bound)

    # Hoist the weight transpose out of the per-call path ([Cin, Cout] stored once).
    w_re_t = jnp.asarray(w_re.T)
    w_im_t = jnp.asarray(w_im.T)

    # Pure-JAX reference (exact CLinear semantics, f32).
    x_re, x_im = x[..., 0], x[..., 1]
    re_lin = lambda t: t @ w_re.T + b_re
    im_lin = lambda t: t @ w_im.T + b_im
    ref = jnp.stack([re_lin(x_re) - im_lin(x_im),
                     re_lin(x_im) + im_lin(x_re)], axis=-1)

    # Exact f32 path: tight tolerance.
    out_f32 = jax.block_until_ready(
        clinear_forward(x, w_re_t, w_im_t, b_re, b_im, compute_dtype=None))
    assert out_f32.shape == (batch, seq, out_channels, 2)
    assert jnp.allclose(out_f32, ref, atol=1e-5, rtol=1e-5)

    # Default bf16-compute / f32-accumulate path: bf16-rounding tolerance.
    out_bf16 = jax.block_until_ready(
        clinear_forward(x, w_re_t, w_im_t, b_re, b_im))
    assert out_bf16.shape == (batch, seq, out_channels, 2)
    assert jnp.allclose(out_bf16, ref, atol=5e-2, rtol=5e-2)

    print("KERNEL_OK")
</pallas_src>

<mosaic_0001>
module attributes {stable_mosaic.version = 11 : i64} {
  func.func @_clinear_kernel(%arg0: i32, %arg1: i32, %arg2: i32, %arg3: memref<2x8x128xf32, #tpu.memory_space<vmem>>, %arg4: memref<128x256xf32, #tpu.memory_space<vmem>>, %arg5: memref<1x128xf32, #tpu.memory_space<vmem>>, %arg6: memref<1x128xf32, #tpu.memory_space<vmem>>, %arg7: memref<2x8x128xf32, #tpu.memory_space<vmem>>, %arg8: memref<16x256xf32, #tpu.memory_space<vmem>>) attributes {dimension_semantics = [#tpu.dimension_semantics<parallel>, #tpu.dimension_semantics<parallel>, #tpu.dimension_semantics<arbitrary>], iteration_bounds = array<i64: 2, 1, 1>, scalar_prefetch = 0 : i64, scratch_operands = 1 : i64, tpu.core_type = #tpu.core_type<tc>, window_params = [{transform_indices = @transform_0, window_bounds = array<i64: 2, 8, 128>}, {transform_indices = @transform_1, window_bounds = array<i64: 128, 256>}, {transform_indices = @transform_2, window_bounds = array<i64: 1, 128>}, {transform_indices = @transform_3, window_bounds = array<i64: 1, 128>}, {transform_indices = @transform_4, window_bounds = array<i64: 2, 8, 128>}]} {
    %c0_i32 = arith.constant 0 : i32
    %0 = arith.cmpi eq, %arg2, %c0_i32 : i32
    %1 = arith.extui %0 : i1 to i32
    %c0_i32_0 = arith.constant 0 : i32
    %2 = arith.cmpi ne, %1, %c0_i32_0 : i32
    scf.if %2 {
      %cst_11 = arith.constant 0.000000e+00 : f32
      %13 = vector.broadcast %cst_11 : f32 to vector<16x256xf32>
      %c0_12 = arith.constant 0 : index
      %c0_13 = arith.constant 0 : index
      %14 = vector.load %arg8[%c0_12, %c0_13] : memref<16x256xf32, #tpu.memory_space<vmem>>, vector<16x256xf32>
      tpu.vector_store %arg8[%c0_12, %c0_13], %13 {strides = array<i32>} : memref<16x256xf32, #tpu.memory_space<vmem>>, vector<16x256xf32>,
    } else {
    }
    %c0 = arith.constant 0 : index
    %c0_1 = arith.constant 0 : index
    %c0_2 = arith.constant 0 : index
    %3 = vector.load %arg3[%c0, %c0_1, %c0_2] : memref<2x8x128xf32, #tpu.memory_space<vmem>>, vector<2x8x128xf32>
    %4 = vector.shape_cast %3 : vector<2x8x128xf32> to vector<16x128xf32>
    %c0_3 = arith.constant 0 : index
    %c0_4 = arith.constant 0 : index
    %5 = vector.load %arg8[%c0_3, %c0_4] : memref<16x256xf32, #tpu.memory_space<vmem>>, vector<16x256xf32>
    %c0_5 = arith.constant 0 : index
    %c0_6 = arith.constant 0 : index
    %6 = vector.load %arg4[%c0_5, %c0_6] : memref<128x256xf32, #tpu.memory_space<vmem>>, vector<128x256xf32>
    %cst = arith.constant dense<0.000000e+00> : vector<16x256xf32>
    %7 = tpu.matmul %4, %6, %cst {dimension_numbers = #tpu.dot_dimension_numbers<[1], [0], [0], [1], [0, 0, 1, 1], [], []>} : vector<16x128xf32>, vector<128x256xf32>, vector<16x256xf32> -> vector<16x256xf32>
    %8 = arith.addf %5, %7 : vector<16x256xf32>
    %c0_7 = arith.constant 0 : index
    %c0_8 = arith.constant 0 : index
    %9 = vector.load %arg8[%c0_7, %c0_8] : memref<16x256xf32, #tpu.memory_space<vmem>>, vector<16x256xf32>
    tpu.vector_store %arg8[%c0_7, %c0_8], %8 {strides = array<i32>} : memref<16x256xf32, #tpu.memory_space<vmem>>, vector<16x256xf32>,
    %c0_i32_9 = arith.constant 0 : i32
    %10 = arith.cmpi eq, %arg2, %c0_i32_9 : i32
    %11 = arith.extui %10 : i1 to i32
    %c0_i32_10 = arith.constant 0 : i32
    %12 = arith.cmpi ne, %11, %c0_i32_10 : i32
    scf.if %12 {
      %c0_11 = arith.constant 0 : index
      %c0_12 = arith.constant 0 : index
      %13 = vector.load %arg8[%c0_11, %c0_12] : memref<16x256xf32, #tpu.memory_space<vmem>>, vector<16x256xf32>
      %14 = vector.extract_strided_slice %13 {offsets = [0, 0], sizes = [8, 128], strides = [1, 1]} : vector<16x256xf32> to vector<8x128xf32>
      %15 = vector.extract_strided_slice %13 {offsets = [0, 128], sizes = [8, 128], strides = [1, 1]} : vector<16x256xf32> to vector<8x128xf32>
      %16 = vector.extract_strided_slice %13 {offsets = [8, 0], sizes = [8, 128], strides = [1, 1]} : vector<16x256xf32> to vector<8x128xf32>
      %17 = vector.extract_strided_slice %13 {offsets = [8, 128], sizes = [8, 128], strides = [1, 1]} : vector<16x256xf32> to vector<8x128xf32>
      %18 = arith.subf %14, %17 : vector<8x128xf32>
      %c0_13 = arith.constant 0 : index
      %c0_14 = arith.constant 0 : index
      %19 = vector.load %arg5[%c0_13, %c0_14] : memref<1x128xf32, #tpu.memory_space<vmem>>, vector<1x128xf32>
      %20 = vector.broadcast %19 : vector<1x128xf32> to vector<8x128xf32>
      %21 = arith.addf %18, %20 : vector<8x128xf32>
      %c0_15 = arith.constant 0 : index
      %c0_16 = arith.constant 0 : index
      %c0_17 = arith.constant 0 : index
      %22 = vector.load %arg7[%c0_15, %c0_16, %c0_17] : memref<2x8x128xf32, #tpu.memory_space<vmem>>, vector<1x8x128xf32>
      %23 = vector.shape_cast %22 : vector<1x8x128xf32> to vector<8x128xf32>
      %24 = vector.shape_cast %21 : vector<8x128xf32> to vector<1x8x128xf32>
      tpu.vector_store %arg7[%c0_15, %c0_16, %c0_17], %24 {strides = array<i32>} : memref<2x8x128xf32, #tpu.memory_space<vmem>>, vector<1x8x128xf32>,
      %25 = arith.addf %16, %15 : vector<8x128xf32>
      %c0_18 = arith.constant 0 : index
      %c0_19 = arith.constant 0 : index
      %26 = vector.load %arg6[%c0_18, %c0_19] : memref<1x128xf32, #tpu.memory_space<vmem>>, vector<1x128xf32>
      %27 = vector.broadcast %26 : vector<1x128xf32> to vector<8x128xf32>
      %28 = arith.addf %25, %27 : vector<8x128xf32>
      %c1 = arith.constant 1 : index
      %c0_20 = arith.constant 0 : index
      %c0_21 = arith.constant 0 : index
      %29 = vector.load %arg7[%c1, %c0_20, %c0_21] : memref<2x8x128xf32, #tpu.memory_space<vmem>>, vector<1x8x128xf32>
      %30 = vector.shape_cast %29 : vector<1x8x128xf32> to vector<8x128xf32>
      %31 = vector.shape_cast %28 : vector<8x128xf32> to vector<1x8x128xf32>
      tpu.vector_store %arg7[%c1, %c0_20, %c0_21], %31 {strides = array<i32>} : memref<2x8x128xf32, #tpu.memory_space<vmem>>, vector<1x8x128xf32>,
    } else {
    }
    return
  }
  func.func @transform_0(%arg0: i32, %arg1: i32, %arg2: i32) -> (i32, i32, i32) {
    %c0_i32 = arith.constant 0 : i32
    %c0_i32_0 = arith.constant 0 : i32
    return %c0_i32, %arg0, %arg2 : i32, i32, i32
  }
  func.func @transform_1(%arg0: i32, %arg1: i32, %arg2: i32) -> (i32, i32) {
    %c0_i32 = arith.constant 0 : i32
    return %arg2, %arg1 : i32, i32
  }
  func.func @transform_2(%arg0: i32, %arg1: i32, %arg2: i32) -> (i32, i32) {
    %c0_i32 = arith.constant 0 : i32
    %c0_i32_0 = arith.constant 0 : i32
    return %c0_i32, %arg1 : i32, i32
  }
  func.func @transform_3(%arg0: i32, %arg1: i32, %arg2: i32) -> (i32, i32) {
    %c0_i32 = arith.constant 0 : i32
    %c0_i32_0 = arith.constant 0 : i32
    return %c0_i32, %arg1 : i32, i32
  }
  func.func @transform_4(%arg0: i32, %arg1: i32, %arg2: i32) -> (i32, i32, i32) {
    %c0_i32 = arith.constant 0 : i32
    %c0_i32_0 = arith.constant 0 : i32
    return %c0_i32, %arg0, %arg1 : i32, i32, i32
  }
}

</mosaic_0001>

<llo_original>
// kernel: clinear_forward.1
$region0: #{clinear_forward.1}
  #allocation0 [shape = 'u32[]', space=smem, size = 0x4, offset = 0x4, fixed_abs, tag = 'smem constant byte address 0x4 - core index']
  #allocation1 [shape = 'u32[144,128]{1,0:T(1,128)}', space=vmem, size = 0x12000, scoped, tag = 'internal scratch']
  #allocation2 [shape = 'f32[16,256]{1,0:T(8,128)}', space=vmem, size = 0x4000, scoped, tag = 'scratch operand']
  %s0 = inlined_call_operand.vmem [shape: f32[2,16,128], index: 0, kind: input, shape index: {}]
  %s1 = inlined_call_operand.vmem [shape: f32[128,256], index: 1, kind: input, shape index: {}]
  %s2 = inlined_call_operand.vmem [shape: f32[1,128], index: 2, kind: input, shape index: {}]
  %s3 = inlined_call_operand.vmem [shape: f32[1,128], index: 3, kind: input, shape index: {}]
  %s4 = inlined_call_operand.vmem [shape: f32[2,16,128], index: 4, kind: output, shape index: {}]
  %s5 = sld [smem:[#allocation0]]
  $region129: #{clinear_forward.1} parent=0
    _
  %s7 = ssub.s32 1, %s5
  %s8 = scalar_select 0, %s7, %s5
  $region1: #{clinear_forward.1} parent=0
    #allocation3 [shape = 'u8[16384]{0}', space=vmem, size = 0x4000, scoped, tag = 'input window, operand 0']
    #allocation4 [shape = 'u8[16384]{0}', space=vmem, size = 0x4000, scoped, tag = 'output window, operand 0']
    loop: start=0, step=1, limit=4
    $region2: #{clinear_forward.1} parent=1 // loop_pre_header
      _
    $region3: #{clinear_forward.1} parent=1 // loop_header
      %s10 = sphi 0, %s14
      %p11 = scmp.ge.s32.totalorder %s10, 4
      %s17 = sphi 0, %s36
      %s18 = sphi 0, %s32
      %s19 = sphi 0, %s28
      %s20 = sphi 0, %s17
      %s21 = sphi 0, %s18
      %s22 = sphi 0, %s19
      %s23 = sphi 0, %s20
      %s24 = sphi 0, %s21
      %s25 = sphi 0, %s22
      %s41 = sphi 0, %s43
      %s44 = sphi 0, %s41
      %s45 = sphi 0, %s44
      %s61 = sphi 0, %s45
      %s69 = sphi 0, %s71
      %s72 = sphi 0, %s69
      %s73 = sphi 0, %s72
      %s89 = sphi 0, %s73
      %s95 = sphi 0, %s97
      %s98 = sphi 0, %s95
      %s99 = sphi 0, %s98
      %s115 = sphi 0, %s99
      %s121 = sphi 0, %s123
      %s124 = sphi 0, %s121
      %s125 = sphi 0, %s124
      %s141 = sphi 0, %s125
      %s149 = sphi 0, %s151
      %s152 = sphi 0, %s149
      %s153 = sphi 0, %s152
      %s169 = sphi 0, %s153
    $region4: #{clinear_forward.1} parent=1 // loop_header_branch
      %13 = sbr.rel (%p11) target = $region8
    $region5: #{clinear_forward.1} parent=1 // loop_body
      %s15 = ssub.s32 %s10, 1
      %s16 = ssub.s32 %s10, 2
      %s26 = sadd.s32 1, %s19
      %p27 = scmp.ge.s32.totalorder %s26, 1
      %s28 = scalar_select %p27, 0, %s26
      %s29 = sadd.s32 1, %s18
      %s30 = scalar_select %p27, %s29, %s18
      %p31 = scmp.ge.s32.totalorder %s30, 1
      %s32 = scalar_select %p31, 0, %s30
      %s33 = sadd.s32 1, %s17
      %s34 = scalar_select %p31, %s33, %s17
      %p35 = scmp.ge.s32.totalorder %s34, 2
      %s36 = scalar_select %p35, 0, %s34
      %s37 = ssub.s32 %s17, %s36
      %s38 = ssub.s32 %s19, %s28
      %s39 = sor.u32 %s37, %s38
      %p40 = scmp.eq.s32.totalorder %s39, 0
      %s42 = sadd.s32 %s41, 1
      %s43 = scalar_select %p40, %s41, %s42
      %p46 = pneg %p40
      %p47 = scmp.eq.s32.totalorder %s10, 1
      %p48 = por %p46, %p47
      %p49 = scmp.ne.s32.totalorder %s41, %s44
      %p50 = scmp.eq.s32.totalorder %s10, 0
      %p51 = por %p49, %p50
      %p52 = scmp.ne.s32.totalorder %s41, %s44
      %p53 = scmp.eq.s32.totalorder %s15, 1
      %p54 = por %p52, %p53
      %p55 = scmp.ne.s32.totalorder %s44, %s45
      %p56 = scmp.eq.s32.totalorder %s15, 0
      %p57 = por %p55, %p56
      %p58 = scmp.ne.s32.totalorder %s44, %s45
      %p59 = scmp.eq.s32.totalorder %s16, 1
      %p60 = por %p58, %p59
      %p62 = scmp.ne.s32.totalorder %s45, %s61
      %p63 = scmp.eq.s32.totalorder %s16, 0
      %p64 = por %p62, %p63
      %s65 = ssub.s32 %s19, %s28
      %s66 = ssub.s32 %s18, %s32
      %s67 = sor.u32 %s65, %s66
      %p68 = scmp.eq.s32.totalorder %s67, 0
      %s70 = sadd.s32 %s69, 1
      %s71 = scalar_select %p68, %s69, %s70
      %p74 = pneg %p68
      %p75 = scmp.eq.s32.totalorder %s10, 1
      %p76 = por %p74, %p75
      %p77 = scmp.ne.s32.totalorder %s69, %s72
      %p78 = scmp.eq.s32.totalorder %s10, 0
      %p79 = por %p77, %p78
      %p80 = scmp.ne.s32.totalorder %s69, %s72
      %p81 = scmp.eq.s32.totalorder %s15, 1
      %p82 = por %p80, %p81
      %p83 = scmp.ne.s32.totalorder %s72, %s73
      %p84 = scmp.eq.s32.totalorder %s15, 0
      %p85 = por %p83, %p84
      %p86 = scmp.ne.s32.totalorder %s72, %s73
      %p87 = scmp.eq.s32.totalorder %s16, 1
      %p88 = por %p86, %p87
      %p90 = scmp.ne.s32.totalorder %s73, %s89
      %p91 = scmp.eq.s32.totalorder %s16, 0
      %p92 = por %p90, %p91
      %s93 = ssub.s32 %s18, %s32
      %p94 = scmp.eq.s32.totalorder %s93, 0
      %s96 = sadd.s32 %s95, 1
      %s97 = scalar_select %p94, %s95, %s96
      %p100 = pneg %p94
      %p101 = scmp.eq.s32.totalorder %s10, 1
      %p102 = por %p100, %p101
      %p103 = scmp.ne.s32.totalorder %s95, %s98
      %p104 = scmp.eq.s32.totalorder %s10, 0
      %p105 = por %p103, %p104
      %p106 = scmp.ne.s32.totalorder %s95, %s98
      %p107 = scmp.eq.s32.totalorder %s15, 1
      %p108 = por %p106, %p107
      %p109 = scmp.ne.s32.totalorder %s98, %s99
      %p110 = scmp.eq.s32.totalorder %s15, 0
      %p111 = por %p109, %p110
      %p112 = scmp.ne.s32.totalorder %s98, %s99
      %p113 = scmp.eq.s32.totalorder %s16, 1
      %p114 = por %p112, %p113
      %p116 = scmp.ne.s32.totalorder %s99, %s115
      %p117 = scmp.eq.s32.totalorder %s16, 0
      %p118 = por %p116, %p117
      %s119 = ssub.s32 %s18, %s32
      %p120 = scmp.eq.s32.totalorder %s119, 0
      %s122 = sadd.s32 %s121, 1
      %s123 = scalar_select %p120, %s121, %s122
      %p126 = pneg %p120
      %p127 = scmp.eq.s32.totalorder %s10, 1
      %p128 = por %p126, %p127
      %p129 = scmp.ne.s32.totalorder %s121, %s124
      %p130 = scmp.eq.s32.totalorder %s10, 0
      %p131 = por %p129, %p130
      %p132 = scmp.ne.s32.totalorder %s121, %s124
      %p133 = scmp.eq.s32.totalorder %s15, 1
      %p134 = por %p132, %p133
      %p135 = scmp.ne.s32.totalorder %s124, %s125
      %p136 = scmp.eq.s32.totalorder %s15, 0
      %p137 = por %p135, %p136
      %p138 = scmp.ne.s32.totalorder %s124, %s125
      %p139 = scmp.eq.s32.totalorder %s16, 1
      %p140 = por %p138, %p139
      %p142 = scmp.ne.s32.totalorder %s125, %s141
      %p143 = scmp.eq.s32.totalorder %s16, 0
      %p144 = por %p142, %p143
      %s145 = ssub.s32 %s17, %s36
      %s146 = ssub.s32 %s18, %s32
      %s147 = sor.u32 %s145, %s146
      %p148 = scmp.eq.s32.totalorder %s147, 0
      %s150 = sadd.s32 %s149, 1
      %s151 = scalar_select %p148, %s149, %s150
      %p154 = pneg %p148
      %p155 = scmp.eq.s32.totalorder %s10, 1
      %p156 = por %p154, %p155
      %p157 = scmp.ne.s32.totalorder %s149, %s152
      %p158 = scmp.eq.s32.totalorder %s10, 0
      %p159 = por %p157, %p158
      %p160 = scmp.ne.s32.totalorder %s149, %s152
      %p161 = scmp.eq.s32.totalorder %s15, 1
      %p162 = por %p160, %p161
      %p163 = scmp.ne.s32.totalorder %s152, %s153
      %p164 = scmp.eq.s32.totalorder %s15, 0
      %p165 = por %p163, %p164
      %p166 = scmp.ne.s32.totalorder %s152, %s153
      %p167 = scmp.eq.s32.totalorder %s16, 1
      %p168 = por %p166, %p167
      %p170 = scmp.ne.s32.totalorder %s153, %s169
      %p171 = scmp.eq.s32.totalorder %s16, 0
      %p172 = por %p170, %p171
      %p173 = scmp.le.s32.totalorder 1, %s10
      %p174 = scmp.lt.s32.totalorder %s10, 3
      %p175 = pnand %p173, %p174
      %p176 = pneg %p175
      // Predicated region
      $region9: #{clinear_forward.1} parent=5 // pred_check
        _
      $region10: #{clinear_forward.1} parent=5 // pred_check_branch
        %178 = sbr.rel (%p175) target = $region12
      $region11: #{clinear_forward.1} parent=5 // pred_region
        %s179 = ssub.s32 %s10, 1
        // Predicated region
        $region13: #{clinear_forward.1} parent=11 // pred_check
          %p180 = pneg %p85
        $region14: #{clinear_forward.1} parent=11 // pred_check_branch
          %182 = sbr.rel (%p180) target = $region16
        $region15: #{clinear_forward.1} parent=11 // pred_region
          %s183 = smul.u32 16, %s22
          %s184 = smul.u32 2, %s21
          %p185 = scmp.lt.s32.totalorder %s183, 15
          %s186 = scalar_select %p185, %s183, 15
          %p187 = scmp.lt.s32.totalorder %s184, 1
          %s188 = scalar_select %p187, %s184, 1
          %s189 = smul.addr %s186, 2
          %s190 = sadd.s32 %s188, %s189
          %s191 = smul.addr %s190, 8
          %s192 = scalar_lea.vmem %s1, %s191
          %s193 = smul.u32 16, %s22
          %s194 = smul.u32 2, %s21
        $region16: #{clinear_forward.1} parent=11 // pred_fallthru
          _
        // Predicated region
        $region17: #{clinear_forward.1} parent=11 // pred_check
          %p195 = pneg %p111
        $region18: #{clinear_forward.1} parent=11 // pred_check_branch
          %197 = sbr.rel (%p195) target = $region20
        $region19: #{clinear_forward.1} parent=11 // pred_region
          %p198 = scmp.lt.s32.totalorder %s21, 0
          %s199 = scalar_select %p198, %s21, 0
          %s200 = scalar_lea.vmem %s2, %s199
        $region20: #{clinear_forward.1} parent=11 // pred_fallthru
          _
        // Predicated region
        $region21: #{clinear_forward.1} parent=11 // pred_check
          %p201 = pneg %p137
        $region22: #{clinear_forward.1} parent=11 // pred_check_branch
          %203 = sbr.rel (%p201) target = $region24
        $region23: #{clinear_forward.1} parent=11 // pred_region
          %p204 = scmp.lt.s32.totalorder %s21, 0
          %s205 = scalar_select %p204, %s21, 0
          %s206 = scalar_lea.vmem %s3, %s205
        $region24: #{clinear_forward.1} parent=11 // pred_fallthru
          _
      $region12: #{clinear_forward.1} parent=5 // pred_fallthru
        _
      %p207 = scmp.lt.s32.totalorder %s10, 2
      // Predicated region
      $region25: #{clinear_forward.1} parent=5 // pred_check
        %p208 = pneg %p207
      $region26: #{clinear_forward.1} parent=5 // pred_check_branch
        %210 = sbr.rel (%p208) target = $region28
      $region27: #{clinear_forward.1} parent=5 // pred_region
        // Predicated region
        $region29: #{clinear_forward.1} parent=27 // pred_check
          %p211 = pneg %p51
        $region30: #{clinear_forward.1} parent=27 // pred_check_branch
          %213 = sbr.rel (%p211) target = $region32
        $region31: #{clinear_forward.1} parent=27 // pred_region
          %s214 = sand.u32 %s41, 1
          %s215 = sand.u32 %s41, 1
          %s216 = smul.addr %s215, 16
          %s217 = scalar_lea.vmem [#allocation3], %s216
          %s218 = sadd.s32 %s19, %s17
          %s219 = smul.addr %s218, 8
          %s220 = scalar_lea.vmem %s0, %s219
          // Predicated region
          $region33: #{clinear_forward.1} parent=31 // pred_check
            _
          $region34: #{clinear_forward.1} parent=31 // pred_check_branch
            %222 = sbr.rel (0) target = $region36
          $region35: #{clinear_forward.1} parent=31 // pred_region
            // Predicated region
            $region37: #{clinear_forward.1} parent=35 // pred_check
              _
            $region38: #{clinear_forward.1} parent=35 // pred_check_branch
              %224 = sbr.rel (0) target = $region40
            $region39: #{clinear_forward.1} parent=35 // pred_region
              // Predicated region
              $region52: #{clinear_forward.1} parent=39 // pred_check
                _
              $region53: #{clinear_forward.1} parent=39 // pred_check_branch
                %241 = sbr.rel (0) target = $region55
              $region54: #{clinear_forward.1} parent=39 // pred_region
                loop: start=0, step=1, limit=1
                $region56: #{clinear_forward.1} parent=54 // loop_pre_header
                  _
                $region57: #{clinear_forward.1} parent=54 // loop_header
                  %s243 = sphi 0, %s247
                  %p244 = scmp.ge.s32.totalorder %s243, 1
                  %s248 = sphi %s220, %s220
                  %s249 = sphi %s217, %s217
                $region58: #{clinear_forward.1} parent=54 // loop_header_branch
                  %246 = sbr.rel (%p244) target = $region62
                $region59: #{clinear_forward.1} parent=54 // loop_body
                  %v250 = vld [vmem:[%s248] sm:$0xff]
                  %251 = vst [vmem:[%s249] sm:$0xff] %v250
                  %v252 = vld [vmem:[%s248 + $0x10] sm:$0xff]
                  %253 = vst [vmem:[%s249 + $0x8] sm:$0xff] %v252
                $region60: #{clinear_forward.1} parent=54 // loop_footer
                  %s247 = sadd.s32 1, %s243
                $region61: #{clinear_forward.1} parent=54 // loop_footer_branch
                  %242 = sbr.rel target = $region57
                $region62: #{clinear_forward.1} parent=54 // loop_exit
                  _
              $region55: #{clinear_forward.1} parent=39 // pred_fallthru
                _
              // Predicated region
              $region63: #{clinear_forward.1} parent=39 // pred_check
                _
              $region64: #{clinear_forward.1} parent=39 // pred_check_branch
                %255 = sbr.rel target = $region66
              $region65: #{clinear_forward.1} parent=39 // pred_region
                _
              $region66: #{clinear_forward.1} parent=39 // pred_fallthru
                _
            $region40: #{clinear_forward.1} parent=35 // pred_fallthru
              _
            // Predicated region
            $region41: #{clinear_forward.1} parent=35 // pred_check
              _
            $region42: #{clinear_forward.1} parent=35 // pred_check_branch
              %226 = sbr.rel target = $region44
            $region43: #{clinear_forward.1} parent=35 // pred_region
              loop: start=0, step=1, limit=1
              $region45: #{clinear_forward.1} parent=43 // loop_pre_header
                _
              $region46: #{clinear_forward.1} parent=43 // loop_header
                %s229 = sphi 0, %s233
                %p230 = scmp.ge.s32.totalorder %s229, 1
                %s234 = sphi %s220, %s220
                %s235 = sphi %s217, %s217
              $region47: #{clinear_forward.1} parent=43 // loop_header_branch
                %232 = sbr.rel (%p230) target = $region51
              $region48: #{clinear_forward.1} parent=43 // loop_body
                %v236 = vld [vmem:[%s234] sm:$0xff]
                %237 = vst [vmem:[%s235] sm:$0xff] %v236
                %v238 = vld [vmem:[%s234 + $0x10] sm:$0xff]
                %239 = vst [vmem:[%s235 + $0x8] sm:$0xff] %v238
              $region49: #{clinear_forward.1} parent=43 // loop_footer
                %s233 = sadd.s32 1, %s229
              $region50: #{clinear_forward.1} parent=43 // loop_footer_branch
                %228 = sbr.rel target = $region46
              $region51: #{clinear_forward.1} parent=43 // loop_exit
                _
            $region44: #{clinear_forward.1} parent=35 // pred_fallthru
              _
          $region36: #{clinear_forward.1} parent=31 // pred_fallthru
            _
          %256 = vnop
        $region32: #{clinear_forward.1} parent=27 // pred_fallthru
          _
      $region28: #{clinear_forward.1} parent=5 // pred_fallthru
        _
      %p257 = scmp.le.s32.totalorder 1, %s10
      %p258 = scmp.lt.s32.totalorder %s10, 3
      %p259 = pnand %p257, %p258
      %p260 = pneg %p259
      // Predicated region
      $region67: #{clinear_forward.1} parent=5 // pred_check
        _
      $region68: #{clinear_forward.1} parent=5 // pred_check_branch
        %262 = sbr.rel (%p259) target = $region70
      $region69: #{clinear_forward.1} parent=5 // pred_region
        %s263 = ssub.s32 %s10, 1
        %s264 = sand.u32 %s44, 1
        %s265 = sand.u32 %s44, 1
        %s266 = smul.addr %s265, 16
        %s267 = scalar_lea.vmem [#allocation3], %s266
        // Predicated region
        $region71: #{clinear_forward.1} parent=69 // pred_check
          %p268 = pneg %p57
        $region72: #{clinear_forward.1} parent=69 // pred_check_branch
          %270 = sbr.rel (%p268) target = $region74
        $region73: #{clinear_forward.1} parent=69 // pred_region
          _
        $region74: #{clinear_forward.1} parent=69 // pred_fallthru
          _
        %s271 = sand.u32 %s44, 1
        %s272 = sand.u32 %s44, 1
        %s273 = smul.addr %s272, 16
        %s274 = scalar_lea.vmem [#allocation3], %s273
        %p275 = pneg %p57
        %p276 = pneg %p54
        %s277 = smul.u32 16, %s22
        %s278 = smul.u32 2, %s21
        %p279 = scmp.lt.s32.totalorder %s277, 15
        %s280 = scalar_select %p279, %s277, 15
        %p281 = scmp.lt.s32.totalorder %s278, 1
        %s282 = scalar_select %p281, %s278, 1
        %s283 = smul.addr %s280, 2
        %s284 = sadd.s32 %s282, %s283
        %s285 = smul.addr %s284, 8
        %s286 = scalar_lea.vmem %s1, %s285
        %p287 = pneg %p85
        %p288 = pneg %p82
        %p289 = scmp.lt.s32.totalorder %s21, 0
        %s290 = scalar_select %p289, %s21, 0
        %s291 = scalar_lea.vmem %s2, %s290
        %p292 = pneg %p111
        %p293 = pneg %p108
        %p294 = scmp.lt.s32.totalorder %s21, 0
        %s295 = scalar_select %p294, %s21, 0
        %s296 = scalar_lea.vmem %s3, %s295
        %p297 = pneg %p137
        %p298 = pneg %p134
        %p299 = pneg %p165
        %p300 = pneg %p162
        %s301 = sand.u32 %s152, 1
        %s302 = sand.u32 %s152, 1
        %s303 = smul.addr %s302, 16
        %s304 = scalar_lea.vmem [#allocation4], %s303
        %s305 = smul.u32 16, %s22
        %s306 = smul.u32 2, %s21
        %p307 = scmp.lt.s32.totalorder %s305, 15
        %s308 = scalar_select %p307, %s305, 15
        %p309 = scmp.lt.s32.totalorder %s306, 1
        %s310 = scalar_select %p309, %s306, 1
        %s311 = smul.addr %s308, 2
        %s312 = sadd.s32 %s310, %s311
        %s313 = smul.addr %s312, 8
        %s314 = scalar_lea.vmem %s1, %s313
        %s315 = smul.u32 16, %s22
        %s316 = smul.u32 2, %s21
        %p317 = scmp.lt.s32.totalorder %s21, 0
        %s318 = scalar_select %p317, %s21, 0
        %s319 = scalar_lea.vmem %s2, %s318
        %p320 = scmp.lt.s32.totalorder %s21, 0
        %s321 = scalar_select %p320, %s21, 0
        %s322 = scalar_lea.vmem %s3, %s321
        %p323 = scmp.eq.s32.totalorder %s22, 0
        // Predicated region
        $region75: #{clinear_forward.1} parent=69 // pred_check
          %p324 = pneg %p323
        $region76: #{clinear_forward.1} parent=69 // pred_check_branch
          %326 = sbr.rel (%p324) target = $region78
        $region77: #{clinear_forward.1} parent=69 // pred_region
          %327 = vst [vmem:[#allocation2] sm:$0xff] 0.0
          %328 = vst [vmem:[#allocation2 + $0x8] sm:$0xff] 0.0
          %329 = vst [vmem:[#allocation2 + $0x10] sm:$0xff] 0.0
          %330 = vst [vmem:[#allocation2 + $0x18] sm:$0xff] 0.0
        $region78: #{clinear_forward.1} parent=69 // pred_fallthru
          _
        %v331 = vld [vmem:[%s267] sm:$0xff]
        %v332 = vld [vmem:[%s267 + $0x8] sm:$0xff]
        %v333 = vld [vmem:[#allocation2] sm:$0xff]
        %v334 = vld [vmem:[#allocation2 + $0x8] sm:$0xff]
        %v335 = vld [vmem:[#allocation2 + $0x10] sm:$0xff]
        %v336 = vld [vmem:[#allocation2 + $0x18] sm:$0xff]
        %v337 = vld [vmem:[%s314] sm:$0xff]
        %v338 = vld [vmem:[%s314 + $0x8] sm:$0xff]
        %v339 = vld [vmem:[%s314 + $0x10] sm:$0xff]
        %v340 = vld [vmem:[%s314 + $0x18] sm:$0xff]
        %v341 = vld [vmem:[%s314 + $0x20] sm:$0xff]
        %v342 = vld [vmem:[%s314 + $0x28] sm:$0xff]
        %v343 = vld [vmem:[%s314 + $0x30] sm:$0xff]
        %v344 = vld [vmem:[%s314 + $0x38] sm:$0xff]
        %v345 = vld [vmem:[%s314 + $0x40] sm:$0xff]
        %v346 = vld [vmem:[%s314 + $0x48] sm:$0xff]
        %v347 = vld [vmem:[%s314 + $0x50] sm:$0xff]
        %v348 = vld [vmem:[%s314 + $0x58] sm:$0xff]
        %v349 = vld [vmem:[%s314 + $0x60] sm:$0xff]
        %v350 = vld [vmem:[%s314 + $0x68] sm:$0xff]
        %v351 = vld [vmem:[%s314 + $0x70] sm:$0xff]
        %v352 = vld [vmem:[%s314 + $0x78] sm:$0xff]
        %v353 = vld [vmem:[%s314 + $0x80] sm:$0xff]
        %v354 = vld [vmem:[%s314 + $0x88] sm:$0xff]
        %v355 = vld [vmem:[%s314 + $0x90] sm:$0xff]
        %v356 = vld [vmem:[%s314 + $0x98] sm:$0xff]
        %v357 = vld [vmem:[%s314 + $0xa0] sm:$0xff]
        %v358 = vld [vmem:[%s314 + $0xa8] sm:$0xff]
        %v359 = vld [vmem:[%s314 + $0xb0] sm:$0xff]
        %v360 = vld [vmem:[%s314 + $0xb8] sm:$0xff]
        %v361 = vld [vmem:[%s314 + $0xc0] sm:$0xff]
        %v362 = vld [vmem:[%s314 + $0xc8] sm:$0xff]
        %v363 = vld [vmem:[%s314 + $0xd0] sm:$0xff]
        %v364 = vld [vmem:[%s314 + $0xd8] sm:$0xff]
        %v365 = vld [vmem:[%s314 + $0xe0] sm:$0xff]
        %v366 = vld [vmem:[%s314 + $0xe8] sm:$0xff]
        %v367 = vld [vmem:[%s314 + $0xf0] sm:$0xff]
        %v368 = vld [vmem:[%s314 + $0xf8] sm:$0xff]
        %369 = vmatprep.subr.mxu0 %v338
        %370 = vmatpush1.msra.mxu0 %v337
        %371 = vmatprep.subr.mxu0 %v340
        %372 = vmatpush1.msra.mxu0 %v339
        %373 = vmatprep.subr.mxu0 %v342
        %374 = vmatpush1.msra.mxu0 %v341
        %375 = vmatprep.subr.mxu0 %v344
        %376 = vmatpush1.msra.mxu0 %v343
        %377 = vmatprep.subr.mxu0 %v346
        %378 = vmatpush1.msra.mxu0 %v345
        %379 = vmatprep.subr.mxu0 %v348
        %380 = vmatpush1.msra.mxu0 %v347
        %381 = vmatprep.subr.mxu0 %v350
        %382 = vmatpush1.msra.mxu0 %v349
        %383 = vmatprep.subr.mxu0 %v352
        %384 = vmatpush1.msra.mxu0 %v351
        %385 = vmatprep.subr.mxu0 %v354
        %386 = vmatpush1.msra.mxu0 %v353
        %387 = vmatprep.subr.mxu0 %v356
        %388 = vmatpush1.msra.mxu0 %v355
        %389 = vmatprep.subr.mxu0 %v358
        %390 = vmatpush1.msra.mxu0 %v357
        %391 = vmatprep.subr.mxu0 %v360
        %392 = vmatpush1.msra.mxu0 %v359
        %393 = vmatprep.subr.mxu0 %v362
        %394 = vmatpush1.msra.mxu0 %v361
        %395 = vmatprep.subr.mxu0 %v364
        %396 = vmatpush1.msra.mxu0 %v363
        %397 = vmatprep.subr.mxu0 %v366
        %398 = vmatpush1.msra.mxu0 %v365
        %399 = vmatprep.subr.mxu0 %v368
        %400 = vmatpush1.msra.mxu0 %v367
        %401 = vmatprep.subr.mxu0 0.0
        %402 = vmatpush1.msra.mxu0 0.0
        %403 = vmatprep.subr.mxu0 0.0
        %404 = vmatpush1.msra.mxu0 0.0
        %405 = vmatprep.subr.mxu0 0.0
        %406 = vmatpush1.msra.mxu0 0.0
        %407 = vmatprep.subr.mxu0 0.0
        %408 = vmatpush1.msra.mxu0 0.0
        %409 = vmatprep.subr.mxu0 0.0
        %410 = vmatpush1.msra.mxu0 0.0
        %411 = vmatprep.subr.mxu0 0.0
        %412 = vmatpush1.msra.mxu0 0.0
        %413 = vmatprep.subr.mxu0 0.0
        %414 = vmatpush1.msra.mxu0 0.0
        %415 = vmatprep.subr.mxu0 0.0
        %416 = vmatpush1.msra.mxu0 0.0
        %417 = vmatprep.subr.mxu0 0.0
        %418 = vmatpush1.msra.mxu0 0.0
        %419 = vmatprep.subr.mxu0 0.0
        %420 = vmatpush1.msra.mxu0 0.0
        %421 = vmatprep.subr.mxu0 0.0
        %422 = vmatpush1.msra.mxu0 0.0
        %423 = vmatprep.subr.mxu0 0.0
        %424 = vmatpush1.msra.mxu0 0.0
        %425 = vmatprep.subr.mxu0 0.0
        %426 = vmatpush1.msra.mxu0 0.0
        %427 = vmatprep.subr.mxu0 0.0
        %428 = vmatpush1.msra.mxu0 0.0
        %429 = vmatprep.subr.mxu0 0.0
        %430 = vmatpush1.msra.mxu0 0.0
        %431 = vmatprep.subr.mxu0 0.0
        %432 = vmatpush1.msra.mxu0 0.0
        %433 = vmatprep.mubr.f32.mxu0 0.0
        %434 = vmatmul.mubr.f32.gmra.mrb[0].mxu0 %v331
        %v435 = vpop.f32.mrb[0].mxu0
        %v436 = vadd.f32 0.0, %v435
        %v437 = vpop.f32.mrb[0].mxu0
        %v438 = vadd.f32 0.0, %v437
        %439 = vmatprep.mubr.f32.mxu0 0.0
        %440 = vmatmul.mubr.f32.gmra.mrb[0].mxu0 %v332
        %v441 = vpop.f32.mrb[0].mxu0
        %v442 = vadd.f32 0.0, %v441
        %v443 = vpop.f32.mrb[0].mxu0
        %v444 = vadd.f32 0.0, %v443
        %445 = vdwg.mxu0
        %v446 = vadd.f32 %v333, %v436
        %v447 = vadd.f32 %v334, %v438
        %v448 = vadd.f32 %v335, %v442
        %v449 = vadd.f32 %v336, %v444
        %450 = vst [vmem:[#allocation2] sm:$0xff] %v446
        %451 = vst [vmem:[#allocation2 + $0x8] sm:$0xff] %v447
        %452 = vst [vmem:[#allocation2 + $0x10] sm:$0xff] %v448
        %453 = vst [vmem:[#allocation2 + $0x18] sm:$0xff] %v449
        // Predicated region
        $region79: #{clinear_forward.1} parent=69 // pred_check
          %p454 = pneg %p323
        $region80: #{clinear_forward.1} parent=69 // pred_check_branch
          %456 = sbr.rel (%p454) target = $region82
        $region81: #{clinear_forward.1} parent=69 // pred_region
          %v457 = vld [vmem:[#allocation2] sm:$0xff]
          %v458 = vld [vmem:[#allocation2 + $0x8] sm:$0xff]
          %v459 = vld [vmem:[#allocation2 + $0x10] sm:$0xff]
          %v460 = vld [vmem:[#allocation2 + $0x18] sm:$0xff]
          %v461 = vsub.f32 %v457, %v460
          %v462 = vld [vmem:[%s319] sm:$0x1]
          %v464 = vlaneseq
          %v465 = vshrl.u32 %v464, 7
          %v466 = vsub.s32 0, %v465
          %v467 = vrot.slane %v462, %v466
          %v469 = vadd.f32 %v461, %v467
          %470 = vst [vmem:[%s304] sm:$0xff] %v469
          %v471 = vadd.f32 %v459, %v458
          %v472 = vld [vmem:[%s322] sm:$0x1]
          %v474 = vlaneseq
          %v475 = vshrl.u32 %v474, 7
          %v476 = vsub.s32 0, %v475
          %v477 = vrot.slane %v472, %v476
          %v479 = vadd.f32 %v471, %v477
          %s480 = scalar_lea.vmem %s304, 8 [#allocation4]
          %481 = vst [vmem:[%s480] sm:$0xff] %v479
        $region82: #{clinear_forward.1} parent=69 // pred_fallthru
          _
        %s482 = sand.u32 %s152, 1
        %s483 = sand.u32 %s152, 1
        %s484 = smul.addr %s483, 16
        %s485 = scalar_lea.vmem [#allocation4], %s484
        // Predicated region
        $region83: #{clinear_forward.1} parent=69 // pred_check
          %p486 = pneg %p162
        $region84: #{clinear_forward.1} parent=69 // pred_check_branch
          %488 = sbr.rel (%p486) target = $region86
        $region85: #{clinear_forward.1} parent=69 // pred_region
          %s489 = sadd.s32 %s21, %s20
          %s490 = smul.addr %s489, 8
          %s491 = scalar_lea.vmem %s4, %s490
          // Predicated region
          $region87: #{clinear_forward.1} parent=85 // pred_check
            _
          $region88: #{clinear_forward.1} parent=85 // pred_check_branch
            %493 = sbr.rel (0) target = $region90
          $region89: #{clinear_forward.1} parent=85 // pred_region
            // Predicated region
            $region91: #{clinear_forward.1} parent=89 // pred_check
              _
            $region92: #{clinear_forward.1} parent=89 // pred_check_branch
              %495 = sbr.rel (0) target = $region94
            $region93: #{clinear_forward.1} parent=89 // pred_region
              // Predicated region
              $region106: #{clinear_forward.1} parent=93 // pred_check
                _
              $region107: #{clinear_forward.1} parent=93 // pred_check_branch
                %512 = sbr.rel (0) target = $region109
              $region108: #{clinear_forward.1} parent=93 // pred_region
                loop: start=0, step=1, limit=1
                $region110: #{clinear_forward.1} parent=108 // loop_pre_header
                  _
                $region111: #{clinear_forward.1} parent=108 // loop_header
                  %s514 = sphi 0, %s518
                  %p515 = scmp.ge.s32.totalorder %s514, 1
                  %s519 = sphi %s485, %s485
                  %s520 = sphi %s491, %s491
                $region112: #{clinear_forward.1} parent=108 // loop_header_branch
                  %517 = sbr.rel (%p515) target = $region116
                $region113: #{clinear_forward.1} parent=108 // loop_body
                  %v521 = vld [vmem:[%s519] sm:$0xff]
                  %522 = vst [vmem:[%s520] sm:$0xff] %v521
                  %v523 = vld [vmem:[%s519 + $0x8] sm:$0xff]
                  %524 = vst [vmem:[%s520 + $0x10] sm:$0xff] %v523
                $region114: #{clinear_forward.1} parent=108 // loop_footer
                  %s518 = sadd.s32 1, %s514
                $region115: #{clinear_forward.1} parent=108 // loop_footer_branch
                  %513 = sbr.rel target = $region111
                $region116: #{clinear_forward.1} parent=108 // loop_exit
                  _
              $region109: #{clinear_forward.1} parent=93 // pred_fallthru
                _
              // Predicated region
              $region117: #{clinear_forward.1} parent=93 // pred_check
                _
              $region118: #{clinear_forward.1} parent=93 // pred_check_branch
                %526 = sbr.rel target = $region120
              $region119: #{clinear_forward.1} parent=93 // pred_region
                _
              $region120: #{clinear_forward.1} parent=93 // pred_fallthru
                _
            $region94: #{clinear_forward.1} parent=89 // pred_fallthru
              _
            // Predicated region
            $region95: #{clinear_forward.1} parent=89 // pred_check
              _
            $region96: #{clinear_forward.1} parent=89 // pred_check_branch
              %497 = sbr.rel target = $region98
            $region97: #{clinear_forward.1} parent=89 // pred_region
              loop: start=0, step=1, limit=1
              $region99: #{clinear_forward.1} parent=97 // loop_pre_header
                _
              $region100: #{clinear_forward.1} parent=97 // loop_header
                %s500 = sphi 0, %s504
                %p501 = scmp.ge.s32.totalorder %s500, 1
                %s505 = sphi %s485, %s485
                %s506 = sphi %s491, %s491
              $region101: #{clinear_forward.1} parent=97 // loop_header_branch
                %503 = sbr.rel (%p501) target = $region105
              $region102: #{clinear_forward.1} parent=97 // loop_body
                %v507 = vld [vmem:[%s505] sm:$0xff]
                %508 = vst [vmem:[%s506] sm:$0xff] %v507
                %v509 = vld [vmem:[%s505 + $0x8] sm:$0xff]
                %510 = vst [vmem:[%s506 + $0x10] sm:$0xff] %v509
              $region103: #{clinear_forward.1} parent=97 // loop_footer
                %s504 = sadd.s32 1, %s500
              $region104: #{clinear_forward.1} parent=97 // loop_footer_branch
                %499 = sbr.rel target = $region100
              $region105: #{clinear_forward.1} parent=97 // loop_exit
                _
            $region98: #{clinear_forward.1} parent=89 // pred_fallthru
              _
          $region90: #{clinear_forward.1} parent=85 // pred_fallthru
            _
          %527 = vnop
        $region86: #{clinear_forward.1} parent=69 // pred_fallthru
          _
      $region70: #{clinear_forward.1} parent=5 // pred_fallthru
        _
      %p528 = scmp.le.s32.totalorder 2, %s10
      // Predicated region
      $region121: #{clinear_forward.1} parent=5 // pred_check
        %p529 = pneg %p528
      $region122: #{clinear_forward.1} parent=5 // pred_check_branch
        %531 = sbr.rel (%p529) target = $region124
      $region123: #{clinear_forward.1} parent=5 // pred_region
        %s532 = ssub.s32 %s10, 2
        // Predicated region
        $region125: #{clinear_forward.1} parent=123 // pred_check
          %p533 = pneg %p168
        $region126: #{clinear_forward.1} parent=123 // pred_check_branch
          %535 = sbr.rel (%p533) target = $region128
        $region127: #{clinear_forward.1} parent=123 // pred_region
          %s536 = sand.u32 %s153, 1
          %s537 = sand.u32 %s153, 1
          %s538 = smul.addr %s537, 16
          %s539 = scalar_lea.vmem [#allocation4], %s538
        $region128: #{clinear_forward.1} parent=123 // pred_fallthru
          _
      $region124: #{clinear_forward.1} parent=5 // pred_fallthru
        _
    $region6: #{clinear_forward.1} parent=1 // loop_footer
      %s14 = sadd.s32 1, %s10
    $region7: #{clinear_forward.1} parent=1 // loop_footer_branch
      %9 = sbr.rel target = $region3
    $region8: #{clinear_forward.1} parent=1 // loop_exit
      _

</llo_original>
